<compile_context>
chip_gen: v7x
topology: tpu7x:2x2x1
jax: 0.10.0
libtpu: 0.0.40
codegen_flags: <defaults>
</compile_context>

<pallas_src>
import jax
import jax.numpy as jnp
from jax.experimental import pallas as pl
from jax.experimental.pallas import tpu as pltpu


def _mmtm_v_kernel(vis_ref, skel_ref,
                   wsq_v_ref, wsq_e_ref, bsq_ref,
                   w_exc_ref, b_exc_ref,
                   out_vis_ref, out_skel_ref):
    vis = vis_ref[...]                                 # (Bt, Cv, S)
    skel = skel_ref[...]                               # (Bt, T, Ce)
    cv = vis.shape[1]

    # Squeeze: per-sample global average pool of each modality.
    # f32 accumulation without materializing an explicit f32 copy of the block.
    vis_mean = jnp.mean(vis, axis=-1, dtype=jnp.float32)   # (Bt, Cv)
    ehr_avg = jnp.mean(skel, axis=1, dtype=jnp.float32)    # (Bt, Ce)

    # fc_squeeze on concat([vis_mean, ehr_avg]) == split-weight form (no concat).
    exc = (jnp.dot(vis_mean, wsq_v_ref[...], preferred_element_type=jnp.float32)
           + jnp.dot(ehr_avg, wsq_e_ref[...], preferred_element_type=jnp.float32)
           + bsq_ref[...])                                  # (Bt, dim_out)
    exc = jnp.maximum(exc, 0.0)                             # ReLU

    # fc_visual and fc_skeleton fused into a single MXU push, then split + sigmoid.
    gates = jax.nn.sigmoid(
        jnp.dot(exc, w_exc_ref[...], preferred_element_type=jnp.float32)
        + b_exc_ref[...])                                   # (Bt, Cv + Ce)
    vis_gate = gates[:, :cv].astype(vis.dtype)              # (Bt, Cv)
    sk_gate = gates[:, cv:].astype(skel.dtype)              # (Bt, Ce)

    # Gating multiplies in the input dtype (no f32 promotion of the big activations).
    out_vis_ref[...] = (vis * vis_gate[:, :, None]).astype(out_vis_ref.dtype)
    # NOTE: Ce < 128 makes this store lane-masked; skeleton is tiny vs. visual, so the
    # layout is kept 3-D rather than risking an in-kernel merge-reshape.
    out_skel_ref[...] = (skel * sk_gate[:, None, :]).astype(out_skel_ref.dtype)


def prepare_params(params, dim_visual):
    """One-time parameter prep (transposes / concat / bias reshapes).

    Done once per model, NOT per forward call; nn.Linear computes y = x @ W.T + b, so
    weights are passed to the kernel already transposed to (in, out) layout.
    """
    w_sq, b_sq = params["fc_squeeze"]    # (dim_out, Cv+Ce), (dim_out,)
    w_v, b_v = params["fc_visual"]       # (Cv, dim_out), (Cv,)
    w_s, b_s = params["fc_skeleton"]     # (Ce, dim_out), (Ce,)
    dim_out = w_sq.shape[0]
    return {
        "wsq_v": jnp.transpose(w_sq[:, :dim_visual]),             # (Cv, dim_out)
        "wsq_e": jnp.transpose(w_sq[:, dim_visual:]),             # (Ce, dim_out)
        "bsq": b_sq.reshape(1, dim_out),                          # (1, dim_out)
        "w_exc": jnp.concatenate(
            [jnp.transpose(w_v), jnp.transpose(w_s)], axis=1),    # (dim_out, Cv+Ce)
        "b_exc": jnp.concatenate([b_v, b_s]).reshape(1, -1),      # (1, Cv+Ce)
    }


def _pick_batch_tile(batch, bytes_per_sample, target_block_bytes=2 << 20):
    """Largest divisor of `batch` keeping one block at ~<=2 MiB (safe with double
    buffering inside the 16/32 MiB scoped-VMEM budgets of v5e/v6e/v7x)."""
    bt = int(max(1, min(batch, target_block_bytes // max(bytes_per_sample, 1))))
    while batch % bt:
        bt -= 1
    return bt


def mmtm_v_forward(visual, skeleton, prepped):
    """visual: (B, Cv, H, W); skeleton: (B, T, Ce); prepped = prepare_params(...)."""
    B, Cv, H, W = visual.shape
    _, T, Ce = skeleton.shape
    S = H * W
    vis_flat = visual.reshape(B, Cv, S)

    wsq_v = prepped["wsq_v"]
    wsq_e = prepped["wsq_e"]
    bsq = prepped["bsq"]
    w_exc = prepped["w_exc"]
    b_exc = prepped["b_exc"]
    dim_out = wsq_v.shape[1]

    vis_bytes_per_sample = Cv * S * visual.dtype.itemsize
    skel_bytes_per_sample = T * Ce * skeleton.dtype.itemsize
    bt = _pick_batch_tile(B, vis_bytes_per_sample + skel_bytes_per_sample)
    grid = (B // bt,)

    batch_map = lambda b: (b, 0, 0)   # tiled over batch only
    full_map = lambda b: (0, 0)       # weights: same (resident) block every step

    in_specs = [
        pl.BlockSpec((bt, Cv, S), batch_map),
        pl.BlockSpec((bt, T, Ce), batch_map),
        pl.BlockSpec(wsq_v.shape, full_map),
        pl.BlockSpec(wsq_e.shape, full_map),
        pl.BlockSpec(bsq.shape, full_map),
        pl.BlockSpec(w_exc.shape, full_map),
        pl.BlockSpec(b_exc.shape, full_map),
    ]
    out_specs = (
        pl.BlockSpec((bt, Cv, S), batch_map),
        pl.BlockSpec((bt, T, Ce), batch_map),
    )

    # Advisory cost: this call is HBM-bandwidth bound (2 reads + 2 writes of activations).
    flops = int(B * (2 * (Cv * S + T * Ce)            # means + gating multiplies
                     + 4 * dim_out * (Cv + Ce)))      # squeeze + fused excitation matmuls
    transcendentals = int(B * (Cv + Ce))              # sigmoids
    bytes_accessed = int(
        2 * (vis_flat.size * visual.dtype.itemsize
             + skeleton.size * skeleton.dtype.itemsize)
        + sum(int(w.size) * w.dtype.itemsize for w in (wsq_v, wsq_e, bsq, w_exc, b_exc)))

    out_vis, out_skel = pl.pallas_call(
        _mmtm_v_kernel,
        out_shape=(
            jax.ShapeDtypeStruct((B, Cv, S), visual.dtype),
            jax.ShapeDtypeStruct((B, T, Ce), skeleton.dtype),
        ),
        grid=grid,
        in_specs=in_specs,
        out_specs=out_specs,
        compiler_params=pltpu.CompilerParams(
            dimension_semantics=("parallel",),        # megacore-shard the batch grid
            vmem_limit_bytes=32 * 1024 * 1024,
        ),
        cost_estimate=pl.CostEstimate(
            flops=flops,
            transcendentals=transcendentals,
            bytes_accessed=bytes_accessed,
        ),
    )(vis_flat, skeleton, wsq_v, wsq_e, bsq, w_exc, b_exc)

    return out_vis.reshape(B, Cv, H, W), out_skel


def init_params(key, dim_visual, dim_ehr, ratio):
    dim = dim_visual + dim_ehr
    dim_out = int(2 * dim / ratio)
    ks = jax.random.split(key, 6)
    scale = 0.1
    return {
        "fc_squeeze": (scale * jax.random.normal(ks[0], (dim_out, dim), jnp.float32),
                       scale * jax.random.normal(ks[1], (dim_out,), jnp.float32)),
        "fc_visual": (scale * jax.random.normal(ks[2], (dim_visual, dim_out), jnp.float32),
                      scale * jax.random.normal(ks[3], (dim_visual,), jnp.float32)),
        "fc_skeleton": (scale * jax.random.normal(ks[4], (dim_ehr, dim_out), jnp.float32),
                        scale * jax.random.normal(ks[5], (dim_ehr,), jnp.float32)),
    }


def _reference_forward(visual, skeleton, params):
    # Pure-JAX mirror of the PyTorch forward, for the correctness check.
    B, Cv = visual.shape[:2]
    vis_view = visual.reshape(B, Cv, -1)
    squeeze = jnp.concatenate([jnp.mean(vis_view, axis=-1),
                               jnp.mean(skeleton, axis=1)], axis=1)
    w_sq, b_sq = params["fc_squeeze"]
    w_v, b_v = params["fc_visual"]
    w_s, b_s = params["fc_skeleton"]
    exc = jnp.maximum(squeeze @ w_sq.T + b_sq, 0.0)
    vis_out = jax.nn.sigmoid(exc @ w_v.T + b_v)
    sk_out = jax.nn.sigmoid(exc @ w_s.T + b_s)
    return visual * vis_out[:, :, None, None], skeleton * sk_out[:, None, :]


if __name__ == "__main__":
    B, Cv, H, W = 2, 8, 16, 16        # visual: (B, Cv, H, W)
    T, Ce = 8, 8                      # skeleton/ehr: (B, T, Ce)
    ratio = 4

    key = jax.random.PRNGKey(0)
    k_vis, k_skel, k_params = jax.random.split(key, 3)
    visual = jax.random.normal(k_vis, (B, Cv, H, W), jnp.float32)
    skeleton = jax.random.normal(k_skel, (B, T, Ce), jnp.float32)
    params = init_params(k_params, Cv, Ce, ratio)
    prepped = prepare_params(params, Cv)   # one-time param prep, outside the hot path

    out_vis, out_skel = mmtm_v_forward(visual, skeleton, prepped)
    jax.block_until_ready((out_vis, out_skel))

    ref_vis, ref_skel = _reference_forward(visual, skeleton, params)
    assert jnp.allclose(out_vis, ref_vis, atol=1e-5, rtol=1e-5)
    assert jnp.allclose(out_skel, ref_skel, atol=1e-5, rtol=1e-5)

    print("KERNEL_OK")
</pallas_src>

<mosaic_0001>
module attributes {stable_mosaic.version = 11 : i64} {
  func.func @_mmtm_v_kernel(%arg0: i32, %arg1: memref<2x8x256xf32, #tpu.memory_space<vmem>>, %arg2: memref<2x8x8xf32, #tpu.memory_space<vmem>>, %arg3: memref<8x8xf32, #tpu.memory_space<vmem>>, %arg4: memref<8x8xf32, #tpu.memory_space<vmem>>, %arg5: memref<1x8xf32, #tpu.memory_space<vmem>>, %arg6: memref<8x16xf32, #tpu.memory_space<vmem>>, %arg7: memref<1x16xf32, #tpu.memory_space<vmem>>, %arg8: memref<2x8x256xf32, #tpu.memory_space<vmem>>, %arg9: memref<2x8x8xf32, #tpu.memory_space<vmem>>) attributes {dimension_semantics = [#tpu.dimension_semantics<parallel>], iteration_bounds = array<i64: 1>, scalar_prefetch = 0 : i64, scratch_operands = 0 : i64, tpu.core_type = #tpu.core_type<tc>, window_params = [{transform_indices = @transform_0, window_bounds = array<i64: 2, 8, 256>}, {transform_indices = @transform_1, window_bounds = array<i64: 2, 8, 8>}, {pipeline_mode = #tpu.pipeline_mode<synchronous>, transform_indices = @transform_2, window_bounds = array<i64: 8, 8>}, {pipeline_mode = #tpu.pipeline_mode<synchronous>, transform_indices = @transform_3, window_bounds = array<i64: 8, 8>}, {pipeline_mode = #tpu.pipeline_mode<synchronous>, transform_indices = @transform_4, window_bounds = array<i64: 1, 8>}, {pipeline_mode = #tpu.pipeline_mode<synchronous>, transform_indices = @transform_5, window_bounds = array<i64: 8, 16>}, {pipeline_mode = #tpu.pipeline_mode<synchronous>, transform_indices = @transform_6, window_bounds = array<i64: 1, 16>}, {transform_indices = @transform_7, window_bounds = array<i64: 2, 8, 256>}, {transform_indices = @transform_8, window_bounds = array<i64: 2, 8, 8>}]} {
    %c0 = arith.constant 0 : index
    %c0_0 = arith.constant 0 : index
    %c0_1 = arith.constant 0 : index
    %0 = vector.load %arg1[%c0, %c0_0, %c0_1] : memref<2x8x256xf32, #tpu.memory_space<vmem>>, vector<2x8x256xf32>
    %c0_2 = arith.constant 0 : index
    %c0_3 = arith.constant 0 : index
    %c0_4 = arith.constant 0 : index
    %1 = vector.load %arg2[%c0_2, %c0_3, %c0_4] : memref<2x8x8xf32, #tpu.memory_space<vmem>>, vector<2x8x8xf32>
    %cst = arith.constant dense<0.000000e+00> : vector<2x8xf32>
    %2 = vector.multi_reduction <add>, %0, %cst [2] : vector<2x8x256xf32> to vector<2x8xf32>
    %cst_5 = arith.constant 2.560000e+02 : f32
    %3 = vector.broadcast %cst_5 : f32 to vector<2x8xf32>
    %4 = arith.divf %2, %3 : vector<2x8xf32>
    %cst_6 = arith.constant dense<0.000000e+00> : vector<2x8xf32>
    %5 = vector.multi_reduction <add>, %1, %cst_6 [1] : vector<2x8x8xf32> to vector<2x8xf32>
    %cst_7 = arith.constant 8.000000e+00 : f32
    %6 = vector.broadcast %cst_7 : f32 to vector<2x8xf32>
    %7 = arith.divf %5, %6 : vector<2x8xf32>
    %c0_8 = arith.constant 0 : index
    %c0_9 = arith.constant 0 : index
    %8 = vector.load %arg3[%c0_8, %c0_9] : memref<8x8xf32, #tpu.memory_space<vmem>>, vector<8x8xf32>
    %cst_10 = arith.constant dense<0.000000e+00> : vector<2x8xf32>
    %9 = tpu.matmul %4, %8, %cst_10 {dimension_numbers = #tpu.dot_dimension_numbers<[1], [0], [0], [1], [0, 0, 1, 1], [], []>} : vector<2x8xf32>, vector<8x8xf32>, vector<2x8xf32> -> vector<2x8xf32>
    %c0_11 = arith.constant 0 : index
    %c0_12 = arith.constant 0 : index
    %10 = vector.load %arg4[%c0_11, %c0_12] : memref<8x8xf32, #tpu.memory_space<vmem>>, vector<8x8xf32>
    %cst_13 = arith.constant dense<0.000000e+00> : vector<2x8xf32>
    %11 = tpu.matmul %7, %10, %cst_13 {dimension_numbers = #tpu.dot_dimension_numbers<[1], [0], [0], [1], [0, 0, 1, 1], [], []>} : vector<2x8xf32>, vector<8x8xf32>, vector<2x8xf32> -> vector<2x8xf32>
    %12 = arith.addf %9, %11 : vector<2x8xf32>
    %c0_14 = arith.constant 0 : index
    %c0_15 = arith.constant 0 : index
    %13 = vector.load %arg5[%c0_14, %c0_15] : memref<1x8xf32, #tpu.memory_space<vmem>>, vector<1x8xf32>
    %14 = vector.broadcast %13 : vector<1x8xf32> to vector<2x8xf32>
    %15 = arith.addf %12, %14 : vector<2x8xf32>
    %cst_16 = arith.constant 0.000000e+00 : f32
    %16 = vector.broadcast %cst_16 : f32 to vector<2x8xf32>
    %17 = arith.maximumf %15, %16 : vector<2x8xf32>
    %c0_17 = arith.constant 0 : index
    %c0_18 = arith.constant 0 : index
    %18 = vector.load %arg6[%c0_17, %c0_18] : memref<8x16xf32, #tpu.memory_space<vmem>>, vector<8x16xf32>
    %cst_19 = arith.constant dense<0.000000e+00> : vector<2x16xf32>
    %19 = tpu.matmul %17, %18, %cst_19 {dimension_numbers = #tpu.dot_dimension_numbers<[1], [0], [0], [1], [0, 0, 1, 1], [], []>} : vector<2x8xf32>, vector<8x16xf32>, vector<2x16xf32> -> vector<2x16xf32>
    %c0_20 = arith.constant 0 : index
    %c0_21 = arith.constant 0 : index
    %20 = vector.load %arg7[%c0_20, %c0_21] : memref<1x16xf32, #tpu.memory_space<vmem>>, vector<1x16xf32>
    %21 = vector.broadcast %20 : vector<1x16xf32> to vector<2x16xf32>
    %22 = arith.addf %19, %21 : vector<2x16xf32>
    %23 = arith.negf %22 : vector<2x16xf32>
    %24 = math.exp %23 : vector<2x16xf32>
    %cst_22 = arith.constant 1.000000e+00 : f32
    %25 = vector.broadcast %cst_22 : f32 to vector<2x16xf32>
    %26 = arith.addf %25, %24 : vector<2x16xf32>
    %27 = arith.divf %25, %26 : vector<2x16xf32>
    %28 = vector.extract_strided_slice %27 {offsets = [0, 0], sizes = [2, 8], strides = [1, 1]} : vector<2x16xf32> to vector<2x8xf32>
    %29 = vector.extract_strided_slice %27 {offsets = [0, 8], sizes = [2, 8], strides = [1, 1]} : vector<2x16xf32> to vector<2x8xf32>
    %30 = vector.shape_cast %28 : vector<2x8xf32> to vector<2x8x1xf32>
    %31 = vector.broadcast %30 : vector<2x8x1xf32> to vector<2x8x256xf32>
    %32 = arith.mulf %0, %31 : vector<2x8x256xf32>
    %c0_23 = arith.constant 0 : index
    %c0_24 = arith.constant 0 : index
    %c0_25 = arith.constant 0 : index
    %33 = vector.load %arg8[%c0_23, %c0_24, %c0_25] : memref<2x8x256xf32, #tpu.memory_space<vmem>>, vector<2x8x256xf32>
    tpu.vector_store %arg8[%c0_23, %c0_24, %c0_25], %32 {strides = array<i32>} : memref<2x8x256xf32, #tpu.memory_space<vmem>>, vector<2x8x256xf32>,
    %34 = vector.shape_cast %29 : vector<2x8xf32> to vector<2x1x8xf32>
    %35 = vector.broadcast %34 : vector<2x1x8xf32> to vector<2x8x8xf32>
    %36 = arith.mulf %1, %35 : vector<2x8x8xf32>
    %c0_26 = arith.constant 0 : index
    %c0_27 = arith.constant 0 : index
    %c0_28 = arith.constant 0 : index
    %37 = vector.load %arg9[%c0_26, %c0_27, %c0_28] : memref<2x8x8xf32, #tpu.memory_space<vmem>>, vector<2x8x8xf32>
    tpu.vector_store %arg9[%c0_26, %c0_27, %c0_28], %36 {strides = array<i32>} : memref<2x8x8xf32, #tpu.memory_space<vmem>>, vector<2x8x8xf32>,
    return
  }
  func.func @transform_0(%arg0: i32) -> (i32, i32, i32) {
    %c0_i32 = arith.constant 0 : i32
    %c0_i32_0 = arith.constant 0 : i32
    %c0_i32_1 = arith.constant 0 : i32
    return %arg0, %c0_i32, %c0_i32_0 : i32, i32, i32
  }
  func.func @transform_1(%arg0: i32) -> (i32, i32, i32) {
    %c0_i32 = arith.constant 0 : i32
    %c0_i32_0 = arith.constant 0 : i32
    %c0_i32_1 = arith.constant 0 : i32
    return %arg0, %c0_i32, %c0_i32_0 : i32, i32, i32
  }
  func.func @transform_2(%arg0: i32) -> (i32, i32) {
    %c0_i32 = arith.constant 0 : i32
    %c0_i32_0 = arith.constant 0 : i32
    %c0_i32_1 = arith.constant 0 : i32
    return %c0_i32, %c0_i32_0 : i32, i32
  }
  func.func @transform_3(%arg0: i32) -> (i32, i32) {
    %c0_i32 = arith.constant 0 : i32
    %c0_i32_0 = arith.constant 0 : i32
    %c0_i32_1 = arith.constant 0 : i32
    return %c0_i32, %c0_i32_0 : i32, i32
  }
  func.func @transform_4(%arg0: i32) -> (i32, i32) {
    %c0_i32 = arith.constant 0 : i32
    %c0_i32_0 = arith.constant 0 : i32
    %c0_i32_1 = arith.constant 0 : i32
    return %c0_i32, %c0_i32_0 : i32, i32
  }
  func.func @transform_5(%arg0: i32) -> (i32, i32) {
    %c0_i32 = arith.constant 0 : i32
    %c0_i32_0 = arith.constant 0 : i32
    %c0_i32_1 = arith.constant 0 : i32
    return %c0_i32, %c0_i32_0 : i32, i32
  }
  func.func @transform_6(%arg0: i32) -> (i32, i32) {
    %c0_i32 = arith.constant 0 : i32
    %c0_i32_0 = arith.constant 0 : i32
    %c0_i32_1 = arith.constant 0 : i32
    return %c0_i32, %c0_i32_0 : i32, i32
  }
  func.func @transform_7(%arg0: i32) -> (i32, i32, i32) {
    %c0_i32 = arith.constant 0 : i32
    %c0_i32_0 = arith.constant 0 : i32
    %c0_i32_1 = arith.constant 0 : i32
    return %arg0, %c0_i32, %c0_i32_0 : i32, i32, i32
  }
  func.func @transform_8(%arg0: i32) -> (i32, i32, i32) {
    %c0_i32 = arith.constant 0 : i32
    %c0_i32_0 = arith.constant 0 : i32
    %c0_i32_1 = arith.constant 0 : i32
    return %arg0, %c0_i32, %c0_i32_0 : i32, i32, i32
  }
}

</mosaic_0001>

<llo_original>
// kernel: tpu_custom_call.1
$region0: #{tpu_custom_call.1}
  #allocation0 [shape = 'u32[]', space=smem, size = 0x4, offset = 0x4, fixed_abs, tag = 'smem constant byte address 0x4 - core index']
  #allocation1 [shape = 'u32[144,128]{1,0:T(1,128)}', space=vmem, size = 0x12000, scoped, tag = 'internal scratch']
  %s0 = inlined_call_operand.hbm [shape: f32[2,8,256], index: 0, kind: input, shape index: {}]
  %s1 = inlined_call_operand.hbm [shape: f32[2,8,8], index: 1, kind: input, shape index: {}]
  %s2 = inlined_call_operand.hbm [shape: f32[8,8], index: 2, kind: input, shape index: {}]
  %s3 = inlined_call_operand.vmem [shape: f32[8,8], index: 3, kind: input, shape index: {}]
  %s4 = inlined_call_operand.vmem [shape: f32[1,8], index: 4, kind: input, shape index: {}]
  %s5 = inlined_call_operand.vmem [shape: f32[8,16], index: 5, kind: input, shape index: {}]
  %s6 = inlined_call_operand.vmem [shape: f32[1,16], index: 6, kind: input, shape index: {}]
  %s7 = inlined_call_operand.hbm [shape: f32[2,8,256], index: 7, kind: output, shape index: {0}]
  %s8 = inlined_call_operand.hbm [shape: f32[2,8,8], index: 8, kind: output, shape index: {1}]
  %9 = xla_tuple %s7, %s8
  %s10 = sld [smem:[#allocation0]]
  $region58: #{tpu_custom_call.1} parent=0
    _
  %s12 = ssub.s32 1, %s10
  %s13 = scalar_select 0, %s12, %s10
  $region1: #{tpu_custom_call.1} parent=0
    #allocation2 [shape = 'u8[16384]{0}', space=vmem, size = 0x4000, scoped, tag = 'input window, operand 0, single buffered']
    #allocation3 [shape = 's32[1]{0}', space=sflag, size = 0x4, scoped, tag = 'scoped memory for tpu_custom_call.1']
    #allocation4 [shape = 's32[1]{0}', space=sflag, size = 0x4, scoped, tag = 'scoped memory for tpu_custom_call.1']
    #allocation5 [shape = 'u8[8192]{0}', space=vmem, size = 0x2000, scoped, tag = 'input window, operand 1, single buffered']
    #allocation6 [shape = 's32[1]{0}', space=sflag, size = 0x4, scoped, tag = 'scoped memory for tpu_custom_call.1']
    #allocation7 [shape = 'u8[4096]{0}', space=vmem, size = 0x1000, scoped, tag = 'input window, operand 2, single buffered']
    #allocation8 [shape = 'u8[16384]{0}', space=vmem, size = 0x4000, scoped, tag = 'output window, operand 0, single buffered']
    #allocation9 [shape = 'u8[8192]{0}', space=vmem, size = 0x2000, scoped, tag = 'output window, operand 1, single buffered']
    #allocation10 [shape = 's32[1]{0}', space=sflag, size = 0x4, scoped, tag = 'scoped memory for tpu_custom_call.1']
    %14 = vsyncpa [#allocation3], 0
    %15 = vsyncpa [#allocation6], 0
    %16 = vsyncpa [#allocation4], 0
    %17 = vsyncpa [#allocation10], 0
    // Predicated region
    $region2: #{tpu_custom_call.1} parent=1 // pred_check
      _
    $region3: #{tpu_custom_call.1} parent=1 // pred_check_branch
      %19 = sbr.rel (0) target = $region5
    $region4: #{tpu_custom_call.1} parent=1 // pred_region
      %s21 = ssub.s32 512, 512
      %22 = vsyncadd [#allocation3], %s21
      %s23 = sshll.u32 [#allocation2], 4
      %s24 = int_to_ptr.vmem [resolvable:$true] %s23
      %29 = dma.hbm_to_vmem [thread:$0]  %s0, 512, %s24, [#allocation3], 256, 256, 16
    $region5: #{tpu_custom_call.1} parent=1 // pred_fallthru
      _
    // Predicated region
    $region6: #{tpu_custom_call.1} parent=1 // pred_check
      _
    $region7: #{tpu_custom_call.1} parent=1 // pred_check_branch
      %31 = sbr.rel (0) target = $region9
    $region8: #{tpu_custom_call.1} parent=1 // pred_region
      %s33 = ssub.s32 256, 256
      %34 = vsyncadd [#allocation6], %s33
      %s35 = sshll.u32 [#allocation5], 4
      %s36 = int_to_ptr.vmem [resolvable:$true] %s35
      %41 = dma.hbm_to_vmem [thread:$0]  %s1, 256, %s36, [#allocation6], 128, 128, 8
    $region9: #{tpu_custom_call.1} parent=1 // pred_fallthru
      _
    // Predicated region
    $region10: #{tpu_custom_call.1} parent=1 // pred_check
      _
    $region11: #{tpu_custom_call.1} parent=1 // pred_check_branch
      %43 = sbr.rel (0) target = $region13
    $region12: #{tpu_custom_call.1} parent=1 // pred_region
      %s45 = ssub.s32 128, 128
      %46 = vsyncadd [#allocation6], %s45
      %s48 = sshll.u32 [#allocation7], 4
      %s49 = int_to_ptr.vmem [resolvable:$true] %s48
      %51 = dma.hbm_to_vmem [thread:$0]  %s2, 128, %s49, [#allocation6]
    $region13: #{tpu_custom_call.1} parent=1 // pred_fallthru
      _
    // Predicated region
    $region14: #{tpu_custom_call.1} parent=1 // pred_check
      _
    $region15: #{tpu_custom_call.1} parent=1 // pred_check_branch
      %53 = sbr.rel (0) target = $region17
    $region16: #{tpu_custom_call.1} parent=1 // pred_region
      _
    $region17: #{tpu_custom_call.1} parent=1 // pred_fallthru
      _
    // Predicated region
    $region18: #{tpu_custom_call.1} parent=1 // pred_check
      _
    $region19: #{tpu_custom_call.1} parent=1 // pred_check_branch
      %55 = sbr.rel (0) target = $region21
    $region20: #{tpu_custom_call.1} parent=1 // pred_region
      _
    $region21: #{tpu_custom_call.1} parent=1 // pred_fallthru
      _
    // Predicated region
    $region22: #{tpu_custom_call.1} parent=1 // pred_check
      _
    $region23: #{tpu_custom_call.1} parent=1 // pred_check_branch
      %57 = sbr.rel (0) target = $region25
    $region24: #{tpu_custom_call.1} parent=1 // pred_region
      _
    $region25: #{tpu_custom_call.1} parent=1 // pred_fallthru
      _
    // Predicated region
    $region26: #{tpu_custom_call.1} parent=1 // pred_check
      _
    $region27: #{tpu_custom_call.1} parent=1 // pred_check_branch
      %59 = sbr.rel (0) target = $region29
    $region28: #{tpu_custom_call.1} parent=1 // pred_region
      _
    $region29: #{tpu_custom_call.1} parent=1 // pred_fallthru
      _
    // Predicated region
    $region30: #{tpu_custom_call.1} parent=1 // pred_check
      _
    $region31: #{tpu_custom_call.1} parent=1 // pred_check_branch
      %61 = sbr.rel (0) target = $region33
    $region32: #{tpu_custom_call.1} parent=1 // pred_region
      %62 = dma.done [#allocation3], 512
    $region33: #{tpu_custom_call.1} parent=1 // pred_fallthru
      _
    // Predicated region
    $region34: #{tpu_custom_call.1} parent=1 // pred_check
      _
    $region35: #{tpu_custom_call.1} parent=1 // pred_check_branch
      %64 = sbr.rel (0) target = $region37
    $region36: #{tpu_custom_call.1} parent=1 // pred_region
      %65 = dma.done [#allocation6], 256
    $region37: #{tpu_custom_call.1} parent=1 // pred_fallthru
      _
    // Predicated region
    $region38: #{tpu_custom_call.1} parent=1 // pred_check
      _
    $region39: #{tpu_custom_call.1} parent=1 // pred_check_branch
      %67 = sbr.rel (0) target = $region41
    $region40: #{tpu_custom_call.1} parent=1 // pred_region
      %68 = dma.done [#allocation6], 128
    $region41: #{tpu_custom_call.1} parent=1 // pred_fallthru
      _
    %v69 = vld [vmem:[#allocation2] sm:$0xff]
    %v70 = vld [vmem:[#allocation2 + $0x8] sm:$0xff]
    %v71 = vld [vmem:[#allocation2 + $0x10] sm:$0xff]
    %v72 = vld [vmem:[#allocation2 + $0x18] sm:$0xff]
    %v73 = vld [vmem:[#allocation5] sm:$0xff]
    %v74 = vld [vmem:[#allocation5 + $0x8] sm:$0xff]
    %v75 = vadd.f32 %v69, %v70
    %76 = vadd.xlane.f32.xlu0 %v75
    %v77 = vpop.xlane.xlu0 %76
    %v78 = vadd.f32 %v71, %v72
    %79 = vadd.xlane.f32.xlu0 %v78
    %v80 = vpop.xlane.xlu0 %79
    %v81 = vrcp.pop 256.0
    %v82 = vmul.f32 %v77, %v81
    %v83 = vmul.f32 %v80, %v81
    %vm84 = vcmask 64512
    %v85 = vsel %vm84, %v73, 0.0
    %v86 = vrot.slane %v85, 4
    %v87 = vadd.f32 %v85, %v86
    %v88 = vrot.slane %v87, 2
    %v89 = vadd.f32 %v87, %v88
    %v90 = vrot.slane %v89, 1
    %v91 = vadd.f32 %v89, %v90
    %v92 = vsel %vm84, %v74, 0.0
    %v93 = vrot.slane %v92, 4
    %v94 = vadd.f32 %v92, %v93
    %v95 = vrot.slane %v94, 2
    %v96 = vadd.f32 %v94, %v95
    %v97 = vrot.slane %v96, 1
    %v98 = vadd.f32 %v96, %v97
    %v99 = vrcp.pop 8.0
    %v100 = vmul.f32 %v91, %v99
    %v101 = vmul.f32 %v98, %v99
    %v102 = vld [vmem:[#allocation7] sm:$0xff]
    %v103 = vld [vmem:[%s3] sm:$0xff]
    %vm106 = vcmask 1041409
    %v107 = vsel %vm106, %v101, %v100
    %v108 = vsel %vm84, %v107, 0
    %110 = vmatprep.subr.mxu0 0.0
    %111 = vmatpush1.msra.mxu0 %v103
    %112 = vmatprep.subr.mxu0 0.0
    %113 = vmatpush1.msra.mxu0 0.0
    %114 = vmatprep.subr.mxu0 0.0
    %115 = vmatpush1.msra.mxu0 0.0
    %116 = vmatprep.subr.mxu0 0.0
    %117 = vmatpush1.msra.mxu0 0.0
    %118 = vmatprep.subr.mxu0 0.0
    %119 = vmatpush1.msra.mxu0 0.0
    %120 = vmatprep.subr.mxu0 0.0
    %121 = vmatpush1.msra.mxu0 0.0
    %122 = vmatprep.subr.mxu0 0.0
    %123 = vmatpush1.msra.mxu0 0.0
    %124 = vmatprep.subr.mxu0 0.0
    %125 = vmatpush1.msra.mxu0 0.0
    %126 = vmatprep.subr.mxu0 0.0
    %127 = vmatpush1.msra.mxu0 0.0
    %128 = vmatprep.subr.mxu0 0.0
    %129 = vmatpush1.msra.mxu0 0.0
    %130 = vmatprep.subr.mxu0 0.0
    %131 = vmatpush1.msra.mxu0 0.0
    %132 = vmatprep.subr.mxu0 0.0
    %133 = vmatpush1.msra.mxu0 0.0
    %134 = vmatprep.subr.mxu0 0.0
    %135 = vmatpush1.msra.mxu0 0.0
    %136 = vmatprep.subr.mxu0 0.0
    %137 = vmatpush1.msra.mxu0 0.0
    %138 = vmatprep.subr.mxu0 0.0
    %139 = vmatpush1.msra.mxu0 0.0
    %140 = vmatprep.subr.mxu0 0.0
    %141 = vmatpush1.msra.mxu0 0.0
    %142 = vmatprep.subr.mxu0 0.0
    %143 = vmatpush1.msra.mxu0 0.0
    %144 = vmatprep.subr.mxu0 0.0
    %145 = vmatpush1.msra.mxu0 0.0
    %146 = vmatprep.subr.mxu0 0.0
    %147 = vmatpush1.msra.mxu0 0.0
    %148 = vmatprep.subr.mxu0 0.0
    %149 = vmatpush1.msra.mxu0 0.0
    %150 = vmatprep.subr.mxu0 0.0
    %151 = vmatpush1.msra.mxu0 0.0
    %152 = vmatprep.subr.mxu0 0.0
    %153 = vmatpush1.msra.mxu0 0.0
    %154 = vmatprep.subr.mxu0 0.0
    %155 = vmatpush1.msra.mxu0 0.0
    %156 = vmatprep.subr.mxu0 0.0
    %157 = vmatpush1.msra.mxu0 0.0
    %158 = vmatprep.subr.mxu0 0.0
    %159 = vmatpush1.msra.mxu0 0.0
    %160 = vmatprep.subr.mxu0 0.0
    %161 = vmatpush1.msra.mxu0 0.0
    %162 = vmatprep.subr.mxu0 0.0
    %163 = vmatpush1.msra.mxu0 0.0
    %164 = vmatprep.subr.mxu0 0.0
    %165 = vmatpush1.msra.mxu0 0.0
    %166 = vmatprep.subr.mxu0 0.0
    %167 = vmatpush1.msra.mxu0 0.0
    %168 = vmatprep.subr.mxu0 0.0
    %169 = vmatpush1.msra.mxu0 0.0
    %170 = vmatprep.subr.mxu0 0.0
    %171 = vmatpush1.msra.mxu0 0.0
    %172 = vmatprep.subr.mxu0 0.0
    %173 = vmatpush1.msra.mxu0 0.0
    %174 = vmatprep.mubr.f32.mxu0 0.0
    %175 = vmatmul.mubr.f32.gmra.mrb[0].mxu0 %v108
    %v176 = vpop.f32.mrb[0].mxu0
    %v177 = vadd.f32 0.0, %v176
    %v178 = vpop.f32.mrb[0].mxu0
    %179 = vdwg.mxu0
    %v182 = vlaneseq
    %v183 = vand.u32 %v182, 127
    %v184 = vlaneseq
    %v185 = vshrl.u32 %v184, 7
    %v186 = vsub.s32 %v183, %v185
    %v187 = vrot.slane %v82, %v186
    %v188 = vlaneseq
    %v189 = vshrl.u32 %v188, 7
    %v190 = vsub.s32 %v183, %v189
    %v191 = vrot.slane %v83, %v190
    %v192 = vsel %vm106, %v191, %v187
    %v193 = vsel %vm84, %v192, 0
    %195 = vmatprep.subr.mxu0 0.0
    %196 = vmatpush1.msra.mxu0 %v102
    %197 = vmatprep.subr.mxu0 0.0
    %198 = vmatpush1.msra.mxu0 0.0
    %199 = vmatprep.subr.mxu0 0.0
    %200 = vmatpush1.msra.mxu0 0.0
    %201 = vmatprep.subr.mxu0 0.0
    %202 = vmatpush1.msra.mxu0 0.0
    %203 = vmatprep.subr.mxu0 0.0
    %204 = vmatpush1.msra.mxu0 0.0
    %205 = vmatprep.subr.mxu0 0.0
    %206 = vmatpush1.msra.mxu0 0.0
    %207 = vmatprep.subr.mxu0 0.0
    %208 = vmatpush1.msra.mxu0 0.0
    %209 = vmatprep.subr.mxu0 0.0
    %210 = vmatpush1.msra.mxu0 0.0
    %211 = vmatprep.subr.mxu0 0.0
    %212 = vmatpush1.msra.mxu0 0.0
    %213 = vmatprep.subr.mxu0 0.0
    %214 = vmatpush1.msra.mxu0 0.0
    %215 = vmatprep.subr.mxu0 0.0
    %216 = vmatpush1.msra.mxu0 0.0
    %217 = vmatprep.subr.mxu0 0.0
    %218 = vmatpush1.msra.mxu0 0.0
    %219 = vmatprep.subr.mxu0 0.0
    %220 = vmatpush1.msra.mxu0 0.0
    %221 = vmatprep.subr.mxu0 0.0
    %222 = vmatpush1.msra.mxu0 0.0
    %223 = vmatprep.subr.mxu0 0.0
    %224 = vmatpush1.msra.mxu0 0.0
    %225 = vmatprep.subr.mxu0 0.0
    %226 = vmatpush1.msra.mxu0 0.0
    %227 = vmatprep.subr.mxu0 0.0
    %228 = vmatpush1.msra.mxu0 0.0
    %229 = vmatprep.subr.mxu0 0.0
    %230 = vmatpush1.msra.mxu0 0.0
    %231 = vmatprep.subr.mxu0 0.0
    %232 = vmatpush1.msra.mxu0 0.0
    %233 = vmatprep.subr.mxu0 0.0
    %234 = vmatpush1.msra.mxu0 0.0
    %235 = vmatprep.subr.mxu0 0.0
    %236 = vmatpush1.msra.mxu0 0.0
    %237 = vmatprep.subr.mxu0 0.0
    %238 = vmatpush1.msra.mxu0 0.0
    %239 = vmatprep.subr.mxu0 0.0
    %240 = vmatpush1.msra.mxu0 0.0
    %241 = vmatprep.subr.mxu0 0.0
    %242 = vmatpush1.msra.mxu0 0.0
    %243 = vmatprep.subr.mxu0 0.0
    %244 = vmatpush1.msra.mxu0 0.0
    %245 = vmatprep.subr.mxu0 0.0
    %246 = vmatpush1.msra.mxu0 0.0
    %247 = vmatprep.subr.mxu0 0.0
    %248 = vmatpush1.msra.mxu0 0.0
    %249 = vmatprep.subr.mxu0 0.0
    %250 = vmatpush1.msra.mxu0 0.0
    %251 = vmatprep.subr.mxu0 0.0
    %252 = vmatpush1.msra.mxu0 0.0
    %253 = vmatprep.subr.mxu0 0.0
    %254 = vmatpush1.msra.mxu0 0.0
    %255 = vmatprep.subr.mxu0 0.0
    %256 = vmatpush1.msra.mxu0 0.0
    %257 = vmatprep.subr.mxu0 0.0
    %258 = vmatpush1.msra.mxu0 0.0
    %259 = vmatprep.mubr.f32.mxu0 0.0
    %260 = vmatmul.mubr.f32.gmra.mrb[0].mxu0 %v193
    %v261 = vpop.f32.mrb[0].mxu0
    %v262 = vadd.f32 %v177, %v261
    %v263 = vpop.f32.mrb[0].mxu0
    %264 = vdwg.mxu0
    %v265 = vld [vmem:[%s4] sm:$0x1]
    %v267 = vlaneseq
    %v268 = vshrl.u32 %v267, 7
    %v269 = vsub.s32 0, %v268
    %v270 = vrot.slane %v265, %v269
    %v272 = vadd.f32 %v262, %v270
    %v273 = vmax.f32 %v272, 0.0
    %v274 = vld [vmem:[%s5] sm:$0xff]
    %v275 = vld [vmem:[%s6] sm:$0x1]
    %v277 = vlaneseq
    %v278 = vshrl.u32 %v277, 7
    %v279 = vsub.s32 0, %v278
    %v280 = vrot.slane %v275, %v279
    %v283 = vsel %vm84, %v273, 0
    %285 = vmatprep.subr.mxu0 0.0
    %286 = vmatpush1.msra.mxu0 %v274
    %287 = vmatprep.subr.mxu0 0.0
    %288 = vmatpush1.msra.mxu0 0.0
    %289 = vmatprep.subr.mxu0 0.0
    %290 = vmatpush1.msra.mxu0 0.0
    %291 = vmatprep.subr.mxu0 0.0
    %292 = vmatpush1.msra.mxu0 0.0
    %293 = vmatprep.subr.mxu0 0.0
    %294 = vmatpush1.msra.mxu0 0.0
    %295 = vmatprep.subr.mxu0 0.0
    %296 = vmatpush1.msra.mxu0 0.0
    %297 = vmatprep.subr.mxu0 0.0
    %298 = vmatpush1.msra.mxu0 0.0
    %299 = vmatprep.subr.mxu0 0.0
    %300 = vmatpush1.msra.mxu0 0.0
    %301 = vmatprep.subr.mxu0 0.0
    %302 = vmatpush1.msra.mxu0 0.0
    %303 = vmatprep.subr.mxu0 0.0
    %304 = vmatpush1.msra.mxu0 0.0
    %305 = vmatprep.subr.mxu0 0.0
    %306 = vmatpush1.msra.mxu0 0.0
    %307 = vmatprep.subr.mxu0 0.0
    %308 = vmatpush1.msra.mxu0 0.0
    %309 = vmatprep.subr.mxu0 0.0
    %310 = vmatpush1.msra.mxu0 0.0
    %311 = vmatprep.subr.mxu0 0.0
    %312 = vmatpush1.msra.mxu0 0.0
    %313 = vmatprep.subr.mxu0 0.0
    %314 = vmatpush1.msra.mxu0 0.0
    %315 = vmatprep.subr.mxu0 0.0
    %316 = vmatpush1.msra.mxu0 0.0
    %317 = vmatprep.subr.mxu0 0.0
    %318 = vmatpush1.msra.mxu0 0.0
    %319 = vmatprep.subr.mxu0 0.0
    %320 = vmatpush1.msra.mxu0 0.0
    %321 = vmatprep.subr.mxu0 0.0
    %322 = vmatpush1.msra.mxu0 0.0
    %323 = vmatprep.subr.mxu0 0.0
    %324 = vmatpush1.msra.mxu0 0.0
    %325 = vmatprep.subr.mxu0 0.0
    %326 = vmatpush1.msra.mxu0 0.0
    %327 = vmatprep.subr.mxu0 0.0
    %328 = vmatpush1.msra.mxu0 0.0
    %329 = vmatprep.subr.mxu0 0.0
    %330 = vmatpush1.msra.mxu0 0.0
    %331 = vmatprep.subr.mxu0 0.0
    %332 = vmatpush1.msra.mxu0 0.0
    %333 = vmatprep.subr.mxu0 0.0
    %334 = vmatpush1.msra.mxu0 0.0
    %335 = vmatprep.subr.mxu0 0.0
    %336 = vmatpush1.msra.mxu0 0.0
    %337 = vmatprep.subr.mxu0 0.0
    %338 = vmatpush1.msra.mxu0 0.0
    %339 = vmatprep.subr.mxu0 0.0
    %340 = vmatpush1.msra.mxu0 0.0
    %341 = vmatprep.subr.mxu0 0.0
    %342 = vmatpush1.msra.mxu0 0.0
    %343 = vmatprep.subr.mxu0 0.0
    %344 = vmatpush1.msra.mxu0 0.0
    %345 = vmatprep.subr.mxu0 0.0
    %346 = vmatpush1.msra.mxu0 0.0
    %347 = vmatprep.subr.mxu0 0.0
    %348 = vmatpush1.msra.mxu0 0.0
    %349 = vmatprep.mubr.f32.mxu0 0.0
    %350 = vmatmul.mubr.f32.gmra.mrb[0].mxu0 %v283
    %v351 = vpop.f32.mrb[0].mxu0
    %v352 = vadd.f32 %v280, %v351
    %v353 = vpop.f32.mrb[0].mxu0
    %354 = vdwg.mxu0
    %v355 = vxor.u32 %v352, 2147483648
    %v356 = vmul.f32 %v355, 1.442695
    %v357 = vpow.pop %v356
    %v358 = vadd.f32 %v357, 1.0
    %v359 = vrcp.pop %v358
    %v360 = vmul.f32 1.0, %v359
    %v361 = vlaneseq
    %v362 = vshrl.u32 %v361, 7
    %v363 = vsub.s32 0, %v362
    %v364 = vrot.slane %v360, %v363
    %366 = vbcast.lane.b32.xlu0 %v364, 256
    %v367 = vpop.permute.xlu0 %366
    %v368 = vlaneseq
    %v369 = vshrl.u32 %v368, 7
    %v370 = vsub.s32 1, %v369
    %v371 = vrot.slane %v360, %v370
    %373 = vbcast.lane.b32.xlu0 %v371, 256
    %v374 = vpop.permute.xlu0 %373
    %v375 = vmul.f32 %v69, %v367
    %v376 = vmul.f32 %v70, %v367
    %v377 = vmul.f32 %v71, %v374
    %v378 = vmul.f32 %v72, %v374
    %379 = vst [vmem:[#allocation8] sm:$0xff] %v375
    %380 = vst [vmem:[#allocation8 + $0x8] sm:$0xff] %v376
    %381 = vst [vmem:[#allocation8 + $0x10] sm:$0xff] %v377
    %382 = vst [vmem:[#allocation8 + $0x18] sm:$0xff] %v378
    %v385 = vunpack.c.l.s4 1966171168
    %v386 = vunpack.c.0.s8 %v385
    %v387 = vlaneseq
    %v388 = vshrl.u32 %v387, 7
    %v389 = vsub.s32 %v386, %v388
    %v390 = vrot.slane %v360, %v389
    %v391 = vcombine.high %v390, %v390
    %v393 = vunpack.c.l.s4 1966171168
    %v394 = vunpack.c.0.s8 %v393
    %v395 = vlaneseq
    %v396 = vshrl.u32 %v395, 7
    %v397 = vsub.s32 %v394, %v396
    %v398 = vrot.slane %v390, %v397
    %v400 = vunpack.c.l.s4 1966171168
    %v401 = vunpack.c.0.s8 %v400
    %v402 = vlaneseq
    %v403 = vshrl.u32 %v402, 7
    %v404 = vsub.s32 %v401, %v403
    %v405 = vrot.slane %v391, %v404
    %v406 = vlaneseq
    %v407 = vshrl.u32 %v406, 7
    %v408 = vsub.s32 0, %v407
    %v409 = vrot.slane %v398, %v408
    %v410 = vlaneseq
    %v411 = vshrl.u32 %v410, 7
    %v412 = vsub.s32 0, %v411
    %v413 = vrot.slane %v405, %v412
    %414 = vrot.lane.b32.xlu0 %v409, 120
    %v415 = vpop.permute.xlu0 %414
    %416 = vrot.lane.b32.xlu0 %v413, 120
    %v417 = vpop.permute.xlu0 %416
    %v420 = vmul.f32 %v73, %v415
    %v421 = vmul.f32 %v74, %v417
    %422 = vst.msk [vmem:[#allocation9] sm:$0xff] %vm84, %v420
    %423 = vst.msk [vmem:[#allocation9 + $0x8] sm:$0xff] %vm84, %v421
    // Predicated region
    $region42: #{tpu_custom_call.1} parent=1 // pred_check
      _
    $region43: #{tpu_custom_call.1} parent=1 // pred_check_branch
      %425 = sbr.rel (0) target = $region45
    $region44: #{tpu_custom_call.1} parent=1 // pred_region
      %s427 = ssub.s32 512, 512
      %428 = vsyncadd [#allocation4], %s427
      %s429 = sshll.u32 [#allocation8], 4
      %s430 = int_to_ptr.vmem [resolvable:$true] %s429
      %435 = dma.vmem_to_hbm [thread:$0]  %s430, 512, %s7, [#allocation4], 256, 256, 16
    $region45: #{tpu_custom_call.1} parent=1 // pred_fallthru
      _
    // Predicated region
    $region46: #{tpu_custom_call.1} parent=1 // pred_check
      _
    $region47: #{tpu_custom_call.1} parent=1 // pred_check_branch
      %437 = sbr.rel (0) target = $region49
    $region48: #{tpu_custom_call.1} parent=1 // pred_region
      %s439 = ssub.s32 256, 256
      %440 = vsyncadd [#allocation10], %s439
      %s441 = sshll.u32 [#allocation9], 4
      %s442 = int_to_ptr.vmem [resolvable:$true] %s441
      %447 = dma.vmem_to_hbm [thread:$0]  %s442, 256, %s8, [#allocation10], 128, 128, 8
    $region49: #{tpu_custom_call.1} parent=1 // pred_fallthru
      _
    // Predicated region
    $region50: #{tpu_custom_call.1} parent=1 // pred_check
      _
    $region51: #{tpu_custom_call.1} parent=1 // pred_check_branch
      %449 = sbr.rel (0) target = $region53
    $region52: #{tpu_custom_call.1} parent=1 // pred_region
      %450 = dma.done [#allocation4], 512
    $region53: #{tpu_custom_call.1} parent=1 // pred_fallthru
      _
    // Predicated region
    $region54: #{tpu_custom_call.1} parent=1 // pred_check
      _
    $region55: #{tpu_custom_call.1} parent=1 // pred_check_branch
      %452 = sbr.rel (0) target = $region57
    $region56: #{tpu_custom_call.1} parent=1 // pred_region
      %453 = dma.done [#allocation10], 256
    $region57: #{tpu_custom_call.1} parent=1 // pred_fallthru
      _
    %454 = vsyncpa [#allocation3], 1
    %455 = vsyncpa [#allocation6], 1
    %456 = vsyncpa [#allocation4], 1
    %457 = vsyncpa [#allocation10], 1

</llo_original>
